<compile_context>
chip_gen: v7x
topology: tpu7x:2x2x1
jax: 0.10.0
libtpu: 0.0.40
codegen_flags: <defaults>
</compile_context>

<pallas_src>
import functools

import numpy as np
import jax
import jax.numpy as jnp
from jax.experimental import pallas as pl
from jax.experimental.pallas import tpu as pltpu


def lstm_kernel(x_ref, p_ref, out_ref, *, L, B, E, H):
    # p_ref packs [Wh (H rows) | Wx (E rows) | bias (row 0 of an 8-row pad)].
    params = p_ref[...]                                  # (H+E+8, 4H) f32
    wh = params[0:H, :].astype(jnp.bfloat16)             # (H, 4H), loop-invariant cast
    wx = params[H:H + E, :].astype(jnp.bfloat16)         # (E, 4H)
    b = params[H + E:H + E + 1, :]                       # (1, 4H) f32

    # One dense MXU matmul for the x-projection of every timestep, bias folded
    # in once.  Result (L*B, 4H) = 8 f32 vregs -> keep it in vregs.
    xz = jnp.dot(x_ref[...].astype(jnp.bfloat16), wx,
                 preferred_element_type=jnp.float32) + b  # (L*B, 4H) f32

    h = jnp.zeros((B, H), jnp.float32)                    # h0 = c0 = 0, as in PyTorch
    c = jnp.zeros((B, H), jnp.float32)
    h_parts = []
    c_parts = []

    # Fully static, unrolled recurrence (L = 8).  Only the bf16 recurrent
    # matmul sits on the serial dependence chain.
    for t in range(L):
        z = (jnp.dot(h.astype(jnp.bfloat16), wh,
                     preferred_element_type=jnp.float32)
             + xz[t * B:(t + 1) * B, :])                  # (B, 4H) f32

        # Lane-dense transcendentals on the full 128-lane gate vector; the
        # four (B, H) gate slices are taken only for the final c/h update.
        sig_z = jax.nn.sigmoid(z)
        tanh_z = jnp.tanh(z)
        ft = sig_z[:, 0 * H:1 * H]
        it = sig_z[:, 1 * H:2 * H]
        cc = tanh_z[:, 2 * H:3 * H]
        ot = sig_z[:, 3 * H:4 * H]

        c = ft * c + it * cc
        h = ot * jnp.tanh(c)
        h_parts.append(h)
        c_parts.append(c)

    # Single lane-dense (B, 2*L*H) store: columns [0, L*H) are the h sequence,
    # [L*H, 2*L*H) the c sequence, each in timestep-major blocks of width H.
    out_ref[...] = jnp.concatenate(h_parts + c_parts, axis=1)


def lstm_forward(x, wh, wx, b):
    """x: (L, B, E) f32; wh: (H, 4H); wx: (E, 4H); b: (1, 4H).
    Returns (h_seq, c_seq), each (L, B, H) f32."""
    L, B, E = x.shape
    H = wh.shape[0]
    assert wh.shape == (H, 4 * H) and wx.shape == (E, 4 * H) and b.shape == (1, 4 * H)

    # Flatten (L, B) -> L*B outside the kernel so the in-kernel x-projection is
    # one dense matmul with no in-kernel reshape.
    x2d = x.reshape(L * B, E)

    # Pack Wh / Wx / bias into a single sublane-stacked, 128-lane-dense f32
    # array: one parameter DMA instead of three.
    b_pad = jnp.zeros((8, 4 * H), jnp.float32).at[0].set(b[0])
    params = jnp.concatenate([wh, wx, b_pad], axis=0)     # (H+E+8, 4H)

    out = pl.pallas_call(
        functools.partial(lstm_kernel, L=L, B=B, E=E, H=H),
        out_shape=jax.ShapeDtypeStruct((B, 2 * L * H), jnp.float32),
        # Single invocation: whole operands resident in VMEM, no grid pipeline.
        in_specs=[
            pl.BlockSpec(memory_space=pltpu.MemorySpace.VMEM),   # x2d   (L*B, E)
            pl.BlockSpec(memory_space=pltpu.MemorySpace.VMEM),   # params (H+E+8, 4H)
        ],
        out_specs=pl.BlockSpec(memory_space=pltpu.MemorySpace.VMEM),
    )(x2d, params)

    # Unpack the lane-dense slab back to (L, B, H) / (L, B, H).
    h_seq = out[:, :L * H].reshape(B, L, H).transpose(1, 0, 2)
    c_seq = out[:, L * H:].reshape(B, L, H).transpose(1, 0, 2)
    return h_seq, c_seq


def lstm_reference(x, wh, wx, b):
    """Pure-JAX f32 reference (mirrors the PyTorch loop)."""
    L, B, E = x.shape
    H = wh.shape[0]

    def step(carry, x_t):
        h, c = carry
        z = h @ wh + x_t @ wx + b[0]
        ft = jax.nn.sigmoid(z[:, 0 * H:1 * H])
        it = jax.nn.sigmoid(z[:, 1 * H:2 * H])
        cc = jnp.tanh(z[:, 2 * H:3 * H])
        ot = jax.nn.sigmoid(z[:, 3 * H:4 * H])
        c_new = ft * c + it * cc
        h_new = ot * jnp.tanh(c_new)
        return (h_new, c_new), (h_new, c_new)

    init = (jnp.zeros((B, H), jnp.float32), jnp.zeros((B, H), jnp.float32))
    _, (h_seq, c_seq) = jax.lax.scan(step, init, x)
    return h_seq, c_seq


if __name__ == "__main__":
    # Small shapes consistent with the module's forward:
    #   dim_emb E=16, dim_latent H=32, seq L=8, batch B=8
    # (dim_input / dim_output only matter for embedding()/decode(), unused here)
    L, B, E, H = 8, 8, 16, 32

    key = jax.random.PRNGKey(0)
    kx, kwh, kwx, kb = jax.random.split(key, 4)

    x = jax.random.normal(kx, (L, B, E), dtype=jnp.float32)

    # Deterministic synthetic parameters.  These correspond to the 4 PyTorch
    # Linear(E+H, H) layers: for each gate g, weight_g is (H, H+E) applied to
    # cat((h, x), dim=1).  Here: wh = stack_g(weight_g[:, :H].T)  -> (H, 4H),
    #                            wx = stack_g(weight_g[:, H:].T)  -> (E, 4H),
    #                            b  = stack_g(bias_g)             -> (1, 4H).
    bound = 1.0 / np.sqrt(E + H)
    wh = jax.random.uniform(kwh, (H, 4 * H), jnp.float32, -bound, bound)
    wx = jax.random.uniform(kwx, (E, 4 * H), jnp.float32, -bound, bound)
    b = jax.random.uniform(kb, (1, 4 * H), jnp.float32, -bound, bound)

    h_seq, c_seq = lstm_forward(x, wh, wx, b)
    jax.block_until_ready((h_seq, c_seq))

    h_ref, c_ref = lstm_reference(x, wh, wx, b)
    # bf16 MXU operands with f32 accumulation -> relaxed tolerance vs the
    # pure-f32 reference (values are bounded by 1, so atol is meaningful).
    np.testing.assert_allclose(np.asarray(h_seq), np.asarray(h_ref),
                               rtol=2e-2, atol=2e-2)
    np.testing.assert_allclose(np.asarray(c_seq), np.asarray(c_ref),
                               rtol=2e-2, atol=2e-2)

    print("KERNEL_OK")
</pallas_src>

<mosaic_0001>
module attributes {stable_mosaic.version = 11 : i64} {
  func.func @lstm_kernel(%arg0: memref<64x16xf32, #tpu.memory_space<vmem>>, %arg1: memref<56x128xf32, #tpu.memory_space<vmem>>, %arg2: memref<8x512xf32, #tpu.memory_space<vmem>>) attributes {dimension_semantics = [], scalar_prefetch = 0 : i64, scratch_operands = 0 : i64, tpu.core_type = #tpu.core_type<tc>} {
    %c0 = arith.constant 0 : index
    %c0_0 = arith.constant 0 : index
    %0 = vector.load %arg1[%c0, %c0_0] : memref<56x128xf32, #tpu.memory_space<vmem>>, vector<56x128xf32>
    %1 = vector.extract_strided_slice %0 {offsets = [0, 0], sizes = [32, 128], strides = [1, 1]} : vector<56x128xf32> to vector<32x128xf32>
    %2 = arith.truncf %1 : vector<32x128xf32> to vector<32x128xbf16>
    %3 = vector.extract_strided_slice %0 {offsets = [32, 0], sizes = [16, 128], strides = [1, 1]} : vector<56x128xf32> to vector<16x128xf32>
    %4 = arith.truncf %3 : vector<16x128xf32> to vector<16x128xbf16>
    %5 = vector.extract_strided_slice %0 {offsets = [48, 0], sizes = [1, 128], strides = [1, 1]} : vector<56x128xf32> to vector<1x128xf32>
    %c0_1 = arith.constant 0 : index
    %c0_2 = arith.constant 0 : index
    %6 = vector.load %arg0[%c0_1, %c0_2] : memref<64x16xf32, #tpu.memory_space<vmem>>, vector<64x16xf32>
    %7 = arith.truncf %6 : vector<64x16xf32> to vector<64x16xbf16>
    %cst = arith.constant dense<0.000000e+00> : vector<64x128xf32>
    %8 = tpu.matmul %7, %4, %cst {dimension_numbers = #tpu.dot_dimension_numbers<[1], [0], [0], [1], [0, 0, 1, 1], [], []>} : vector<64x16xbf16>, vector<16x128xbf16>, vector<64x128xf32> -> vector<64x128xf32>
    %9 = vector.broadcast %5 : vector<1x128xf32> to vector<64x128xf32>
    %10 = arith.addf %8, %9 : vector<64x128xf32>
    %cst_3 = arith.constant 0.000000e+00 : f32
    %11 = vector.broadcast %cst_3 : f32 to vector<8x32xf32>
    %cst_4 = arith.constant 0.000000e+00 : f32
    %12 = vector.broadcast %cst_4 : f32 to vector<8x32xf32>
    %13 = arith.truncf %11 : vector<8x32xf32> to vector<8x32xbf16>
    %cst_5 = arith.constant dense<0.000000e+00> : vector<8x128xf32>
    %14 = tpu.matmul %13, %2, %cst_5 {dimension_numbers = #tpu.dot_dimension_numbers<[1], [0], [0], [1], [0, 0, 1, 1], [], []>} : vector<8x32xbf16>, vector<32x128xbf16>, vector<8x128xf32> -> vector<8x128xf32>
    %15 = vector.extract_strided_slice %10 {offsets = [0, 0], sizes = [8, 128], strides = [1, 1]} : vector<64x128xf32> to vector<8x128xf32>
    %16 = arith.addf %14, %15 : vector<8x128xf32>
    %17 = arith.negf %16 : vector<8x128xf32>
    %18 = math.exp %17 : vector<8x128xf32>
    %cst_6 = arith.constant 1.000000e+00 : f32
    %19 = vector.broadcast %cst_6 : f32 to vector<8x128xf32>
    %20 = arith.addf %19, %18 : vector<8x128xf32>
    %21 = arith.divf %19, %20 : vector<8x128xf32>
    %22 = math.tanh %16 : vector<8x128xf32>
    %23 = vector.extract_strided_slice %21 {offsets = [0, 0], sizes = [8, 32], strides = [1, 1]} : vector<8x128xf32> to vector<8x32xf32>
    %24 = vector.extract_strided_slice %21 {offsets = [0, 32], sizes = [8, 32], strides = [1, 1]} : vector<8x128xf32> to vector<8x32xf32>
    %25 = vector.extract_strided_slice %22 {offsets = [0, 64], sizes = [8, 32], strides = [1, 1]} : vector<8x128xf32> to vector<8x32xf32>
    %26 = vector.extract_strided_slice %21 {offsets = [0, 96], sizes = [8, 32], strides = [1, 1]} : vector<8x128xf32> to vector<8x32xf32>
    %27 = arith.mulf %23, %12 : vector<8x32xf32>
    %28 = arith.mulf %24, %25 : vector<8x32xf32>
    %29 = arith.addf %27, %28 : vector<8x32xf32>
    %30 = math.tanh %29 : vector<8x32xf32>
    %31 = arith.mulf %26, %30 : vector<8x32xf32>
    %32 = arith.truncf %31 : vector<8x32xf32> to vector<8x32xbf16>
    %cst_7 = arith.constant dense<0.000000e+00> : vector<8x128xf32>
    %33 = tpu.matmul %32, %2, %cst_7 {dimension_numbers = #tpu.dot_dimension_numbers<[1], [0], [0], [1], [0, 0, 1, 1], [], []>} : vector<8x32xbf16>, vector<32x128xbf16>, vector<8x128xf32> -> vector<8x128xf32>
    %34 = vector.extract_strided_slice %10 {offsets = [8, 0], sizes = [8, 128], strides = [1, 1]} : vector<64x128xf32> to vector<8x128xf32>
    %35 = arith.addf %33, %34 : vector<8x128xf32>
    %36 = arith.negf %35 : vector<8x128xf32>
    %37 = math.exp %36 : vector<8x128xf32>
    %cst_8 = arith.constant 1.000000e+00 : f32
    %38 = vector.broadcast %cst_8 : f32 to vector<8x128xf32>
    %39 = arith.addf %38, %37 : vector<8x128xf32>
    %40 = arith.divf %38, %39 : vector<8x128xf32>
    %41 = math.tanh %35 : vector<8x128xf32>
    %42 = vector.extract_strided_slice %40 {offsets = [0, 0], sizes = [8, 32], strides = [1, 1]} : vector<8x128xf32> to vector<8x32xf32>
    %43 = vector.extract_strided_slice %40 {offsets = [0, 32], sizes = [8, 32], strides = [1, 1]} : vector<8x128xf32> to vector<8x32xf32>
    %44 = vector.extract_strided_slice %41 {offsets = [0, 64], sizes = [8, 32], strides = [1, 1]} : vector<8x128xf32> to vector<8x32xf32>
    %45 = vector.extract_strided_slice %40 {offsets = [0, 96], sizes = [8, 32], strides = [1, 1]} : vector<8x128xf32> to vector<8x32xf32>
    %46 = arith.mulf %42, %29 : vector<8x32xf32>
    %47 = arith.mulf %43, %44 : vector<8x32xf32>
    %48 = arith.addf %46, %47 : vector<8x32xf32>
    %49 = math.tanh %48 : vector<8x32xf32>
    %50 = arith.mulf %45, %49 : vector<8x32xf32>
    %51 = arith.truncf %50 : vector<8x32xf32> to vector<8x32xbf16>
    %cst_9 = arith.constant dense<0.000000e+00> : vector<8x128xf32>
    %52 = tpu.matmul %51, %2, %cst_9 {dimension_numbers = #tpu.dot_dimension_numbers<[1], [0], [0], [1], [0, 0, 1, 1], [], []>} : vector<8x32xbf16>, vector<32x128xbf16>, vector<8x128xf32> -> vector<8x128xf32>
    %53 = vector.extract_strided_slice %10 {offsets = [16, 0], sizes = [8, 128], strides = [1, 1]} : vector<64x128xf32> to vector<8x128xf32>
    %54 = arith.addf %52, %53 : vector<8x128xf32>
    %55 = arith.negf %54 : vector<8x128xf32>
    %56 = math.exp %55 : vector<8x128xf32>
    %cst_10 = arith.constant 1.000000e+00 : f32
    %57 = vector.broadcast %cst_10 : f32 to vector<8x128xf32>
    %58 = arith.addf %57, %56 : vector<8x128xf32>
    %59 = arith.divf %57, %58 : vector<8x128xf32>
    %60 = math.tanh %54 : vector<8x128xf32>
    %61 = vector.extract_strided_slice %59 {offsets = [0, 0], sizes = [8, 32], strides = [1, 1]} : vector<8x128xf32> to vector<8x32xf32>
    %62 = vector.extract_strided_slice %59 {offsets = [0, 32], sizes = [8, 32], strides = [1, 1]} : vector<8x128xf32> to vector<8x32xf32>
    %63 = vector.extract_strided_slice %60 {offsets = [0, 64], sizes = [8, 32], strides = [1, 1]} : vector<8x128xf32> to vector<8x32xf32>
    %64 = vector.extract_strided_slice %59 {offsets = [0, 96], sizes = [8, 32], strides = [1, 1]} : vector<8x128xf32> to vector<8x32xf32>
    %65 = arith.mulf %61, %48 : vector<8x32xf32>
    %66 = arith.mulf %62, %63 : vector<8x32xf32>
    %67 = arith.addf %65, %66 : vector<8x32xf32>
    %68 = math.tanh %67 : vector<8x32xf32>
    %69 = arith.mulf %64, %68 : vector<8x32xf32>
    %70 = arith.truncf %69 : vector<8x32xf32> to vector<8x32xbf16>
    %cst_11 = arith.constant dense<0.000000e+00> : vector<8x128xf32>
    %71 = tpu.matmul %70, %2, %cst_11 {dimension_numbers = #tpu.dot_dimension_numbers<[1], [0], [0], [1], [0, 0, 1, 1], [], []>} : vector<8x32xbf16>, vector<32x128xbf16>, vector<8x128xf32> -> vector<8x128xf32>
    %72 = vector.extract_strided_slice %10 {offsets = [24, 0], sizes = [8, 128], strides = [1, 1]} : vector<64x128xf32> to vector<8x128xf32>
    %73 = arith.addf %71, %72 : vector<8x128xf32>
    %74 = arith.negf %73 : vector<8x128xf32>
    %75 = math.exp %74 : vector<8x128xf32>
    %cst_12 = arith.constant 1.000000e+00 : f32
    %76 = vector.broadcast %cst_12 : f32 to vector<8x128xf32>
    %77 = arith.addf %76, %75 : vector<8x128xf32>
    %78 = arith.divf %76, %77 : vector<8x128xf32>
    %79 = math.tanh %73 : vector<8x128xf32>
    %80 = vector.extract_strided_slice %78 {offsets = [0, 0], sizes = [8, 32], strides = [1, 1]} : vector<8x128xf32> to vector<8x32xf32>
    %81 = vector.extract_strided_slice %78 {offsets = [0, 32], sizes = [8, 32], strides = [1, 1]} : vector<8x128xf32> to vector<8x32xf32>
    %82 = vector.extract_strided_slice %79 {offsets = [0, 64], sizes = [8, 32], strides = [1, 1]} : vector<8x128xf32> to vector<8x32xf32>
    %83 = vector.extract_strided_slice %78 {offsets = [0, 96], sizes = [8, 32], strides = [1, 1]} : vector<8x128xf32> to vector<8x32xf32>
    %84 = arith.mulf %80, %67 : vector<8x32xf32>
    %85 = arith.mulf %81, %82 : vector<8x32xf32>
    %86 = arith.addf %84, %85 : vector<8x32xf32>
    %87 = math.tanh %86 : vector<8x32xf32>
    %88 = arith.mulf %83, %87 : vector<8x32xf32>
    %89 = arith.truncf %88 : vector<8x32xf32> to vector<8x32xbf16>
    %cst_13 = arith.constant dense<0.000000e+00> : vector<8x128xf32>
    %90 = tpu.matmul %89, %2, %cst_13 {dimension_numbers = #tpu.dot_dimension_numbers<[1], [0], [0], [1], [0, 0, 1, 1], [], []>} : vector<8x32xbf16>, vector<32x128xbf16>, vector<8x128xf32> -> vector<8x128xf32>
    %91 = vector.extract_strided_slice %10 {offsets = [32, 0], sizes = [8, 128], strides = [1, 1]} : vector<64x128xf32> to vector<8x128xf32>
    %92 = arith.addf %90, %91 : vector<8x128xf32>
    %93 = arith.negf %92 : vector<8x128xf32>
    %94 = math.exp %93 : vector<8x128xf32>
    %cst_14 = arith.constant 1.000000e+00 : f32
    %95 = vector.broadcast %cst_14 : f32 to vector<8x128xf32>
    %96 = arith.addf %95, %94 : vector<8x128xf32>
    %97 = arith.divf %95, %96 : vector<8x128xf32>
    %98 = math.tanh %92 : vector<8x128xf32>
    %99 = vector.extract_strided_slice %97 {offsets = [0, 0], sizes = [8, 32], strides = [1, 1]} : vector<8x128xf32> to vector<8x32xf32>
    %100 = vector.extract_strided_slice %97 {offsets = [0, 32], sizes = [8, 32], strides = [1, 1]} : vector<8x128xf32> to vector<8x32xf32>
    %101 = vector.extract_strided_slice %98 {offsets = [0, 64], sizes = [8, 32], strides = [1, 1]} : vector<8x128xf32> to vector<8x32xf32>
    %102 = vector.extract_strided_slice %97 {offsets = [0, 96], sizes = [8, 32], strides = [1, 1]} : vector<8x128xf32> to vector<8x32xf32>
    %103 = arith.mulf %99, %86 : vector<8x32xf32>
    %104 = arith.mulf %100, %101 : vector<8x32xf32>
    %105 = arith.addf %103, %104 : vector<8x32xf32>
    %106 = math.tanh %105 : vector<8x32xf32>
    %107 = arith.mulf %102, %106 : vector<8x32xf32>
    %108 = arith.truncf %107 : vector<8x32xf32> to vector<8x32xbf16>
    %cst_15 = arith.constant dense<0.000000e+00> : vector<8x128xf32>
    %109 = tpu.matmul %108, %2, %cst_15 {dimension_numbers = #tpu.dot_dimension_numbers<[1], [0], [0], [1], [0, 0, 1, 1], [], []>} : vector<8x32xbf16>, vector<32x128xbf16>, vector<8x128xf32> -> vector<8x128xf32>
    %110 = vector.extract_strided_slice %10 {offsets = [40, 0], sizes = [8, 128], strides = [1, 1]} : vector<64x128xf32> to vector<8x128xf32>
    %111 = arith.addf %109, %110 : vector<8x128xf32>
    %112 = arith.negf %111 : vector<8x128xf32>
    %113 = math.exp %112 : vector<8x128xf32>
    %cst_16 = arith.constant 1.000000e+00 : f32
    %114 = vector.broadcast %cst_16 : f32 to vector<8x128xf32>
    %115 = arith.addf %114, %113 : vector<8x128xf32>
    %116 = arith.divf %114, %115 : vector<8x128xf32>
    %117 = math.tanh %111 : vector<8x128xf32>
    %118 = vector.extract_strided_slice %116 {offsets = [0, 0], sizes = [8, 32], strides = [1, 1]} : vector<8x128xf32> to vector<8x32xf32>
    %119 = vector.extract_strided_slice %116 {offsets = [0, 32], sizes = [8, 32], strides = [1, 1]} : vector<8x128xf32> to vector<8x32xf32>
    %120 = vector.extract_strided_slice %117 {offsets = [0, 64], sizes = [8, 32], strides = [1, 1]} : vector<8x128xf32> to vector<8x32xf32>
    %121 = vector.extract_strided_slice %116 {offsets = [0, 96], sizes = [8, 32], strides = [1, 1]} : vector<8x128xf32> to vector<8x32xf32>
    %122 = arith.mulf %118, %105 : vector<8x32xf32>
    %123 = arith.mulf %119, %120 : vector<8x32xf32>
    %124 = arith.addf %122, %123 : vector<8x32xf32>
    %125 = math.tanh %124 : vector<8x32xf32>
    %126 = arith.mulf %121, %125 : vector<8x32xf32>
    %127 = arith.truncf %126 : vector<8x32xf32> to vector<8x32xbf16>
    %cst_17 = arith.constant dense<0.000000e+00> : vector<8x128xf32>
    %128 = tpu.matmul %127, %2, %cst_17 {dimension_numbers = #tpu.dot_dimension_numbers<[1], [0], [0], [1], [0, 0, 1, 1], [], []>} : vector<8x32xbf16>, vector<32x128xbf16>, vector<8x128xf32> -> vector<8x128xf32>
    %129 = vector.extract_strided_slice %10 {offsets = [48, 0], sizes = [8, 128], strides = [1, 1]} : vector<64x128xf32> to vector<8x128xf32>
    %130 = arith.addf %128, %129 : vector<8x128xf32>
    %131 = arith.negf %130 : vector<8x128xf32>
    %132 = math.exp %131 : vector<8x128xf32>
    %cst_18 = arith.constant 1.000000e+00 : f32
    %133 = vector.broadcast %cst_18 : f32 to vector<8x128xf32>
    %134 = arith.addf %133, %132 : vector<8x128xf32>
    %135 = arith.divf %133, %134 : vector<8x128xf32>
    %136 = math.tanh %130 : vector<8x128xf32>
    %137 = vector.extract_strided_slice %135 {offsets = [0, 0], sizes = [8, 32], strides = [1, 1]} : vector<8x128xf32> to vector<8x32xf32>
    %138 = vector.extract_strided_slice %135 {offsets = [0, 32], sizes = [8, 32], strides = [1, 1]} : vector<8x128xf32> to vector<8x32xf32>
    %139 = vector.extract_strided_slice %136 {offsets = [0, 64], sizes = [8, 32], strides = [1, 1]} : vector<8x128xf32> to vector<8x32xf32>
    %140 = vector.extract_strided_slice %135 {offsets = [0, 96], sizes = [8, 32], strides = [1, 1]} : vector<8x128xf32> to vector<8x32xf32>
    %141 = arith.mulf %137, %124 : vector<8x32xf32>
    %142 = arith.mulf %138, %139 : vector<8x32xf32>
    %143 = arith.addf %141, %142 : vector<8x32xf32>
    %144 = math.tanh %143 : vector<8x32xf32>
    %145 = arith.mulf %140, %144 : vector<8x32xf32>
    %146 = arith.truncf %145 : vector<8x32xf32> to vector<8x32xbf16>
    %cst_19 = arith.constant dense<0.000000e+00> : vector<8x128xf32>
    %147 = tpu.matmul %146, %2, %cst_19 {dimension_numbers = #tpu.dot_dimension_numbers<[1], [0], [0], [1], [0, 0, 1, 1], [], []>} : vector<8x32xbf16>, vector<32x128xbf16>, vector<8x128xf32> -> vector<8x128xf32>
    %148 = vector.extract_strided_slice %10 {offsets = [56, 0], sizes = [8, 128], strides = [1, 1]} : vector<64x128xf32> to vector<8x128xf32>
    %149 = arith.addf %147, %148 : vector<8x128xf32>
    %150 = arith.negf %149 : vector<8x128xf32>
    %151 = math.exp %150 : vector<8x128xf32>
    %cst_20 = arith.constant 1.000000e+00 : f32
    %152 = vector.broadcast %cst_20 : f32 to vector<8x128xf32>
    %153 = arith.addf %152, %151 : vector<8x128xf32>
    %154 = arith.divf %152, %153 : vector<8x128xf32>
    %155 = math.tanh %149 : vector<8x128xf32>
    %156 = vector.extract_strided_slice %154 {offsets = [0, 0], sizes = [8, 32], strides = [1, 1]} : vector<8x128xf32> to vector<8x32xf32>
    %157 = vector.extract_strided_slice %154 {offsets = [0, 32], sizes = [8, 32], strides = [1, 1]} : vector<8x128xf32> to vector<8x32xf32>
    %158 = vector.extract_strided_slice %155 {offsets = [0, 64], sizes = [8, 32], strides = [1, 1]} : vector<8x128xf32> to vector<8x32xf32>
    %159 = vector.extract_strided_slice %154 {offsets = [0, 96], sizes = [8, 32], strides = [1, 1]} : vector<8x128xf32> to vector<8x32xf32>
    %160 = arith.mulf %156, %143 : vector<8x32xf32>
    %161 = arith.mulf %157, %158 : vector<8x32xf32>
    %162 = arith.addf %160, %161 : vector<8x32xf32>
    %163 = math.tanh %162 : vector<8x32xf32>
    %164 = arith.mulf %159, %163 : vector<8x32xf32>
    %165 = tpu.concatenate %31, %50, %69, %88, %107, %126, %145, %164, %29, %48, %67, %86, %105, %124, %143, %162 in 1 : vector<8x32xf32>, vector<8x32xf32>, vector<8x32xf32>, vector<8x32xf32>, vector<8x32xf32>, vector<8x32xf32>, vector<8x32xf32>, vector<8x32xf32>, vector<8x32xf32>, vector<8x32xf32>, vector<8x32xf32>, vector<8x32xf32>, vector<8x32xf32>, vector<8x32xf32>, vector<8x32xf32>, vector<8x32xf32> -> vector<8x512xf32>
    %c0_21 = arith.constant 0 : index
    %c0_22 = arith.constant 0 : index
    %166 = vector.load %arg2[%c0_21, %c0_22] : memref<8x512xf32, #tpu.memory_space<vmem>>, vector<8x512xf32>
    tpu.vector_store %arg2[%c0_21, %c0_22], %165 {strides = array<i32>} : memref<8x512xf32, #tpu.memory_space<vmem>>, vector<8x512xf32>,
    return
  }
}

</mosaic_0001>

<llo_original>
// kernel: tpu_custom_call.1
$region0: #{tpu_custom_call.1}
  #allocation0 [shape = 'u32[]', space=smem, size = 0x4, offset = 0x4, fixed_abs, tag = 'smem constant byte address 0x4 - core index']
  #allocation1 [shape = 'u32[144,128]{1,0:T(1,128)}', space=vmem, size = 0x12000, scoped, tag = 'internal scratch']
  %s0 = inlined_call_operand.vmem [shape: f32[64,16], index: 0, kind: input, shape index: {}]
  %s1 = inlined_call_operand.vmem [shape: f32[56,128], index: 1, kind: input, shape index: {}]
  %s2 = inlined_call_operand.hbm [shape: f32[8,512], index: 2, kind: output, shape index: {}]
  %s3 = sld [smem:[#allocation0]]
  $region18: #{tpu_custom_call.1} parent=0
    _
  %s5 = ssub.s32 1, %s3
  %s6 = scalar_select 0, %s5, %s3
  $region1: #{tpu_custom_call.1} parent=0
    #allocation2 [shape = 'u8[16384]{0}', space=vmem, size = 0x4000, scoped, tag = 'output window, operand 0, single buffered']
    #allocation3 [shape = 's32[1]{0}', space=sflag, size = 0x4, scoped, tag = 'scoped memory for tpu_custom_call.1']
    %7 = vsyncpa [#allocation3], 0
    // Predicated region
    $region2: #{tpu_custom_call.1} parent=1 // pred_check
      _
    $region3: #{tpu_custom_call.1} parent=1 // pred_check_branch
      %9 = sbr.rel (0) target = $region5
    $region4: #{tpu_custom_call.1} parent=1 // pred_region
      _
    $region5: #{tpu_custom_call.1} parent=1 // pred_fallthru
      _
    // Predicated region
    $region6: #{tpu_custom_call.1} parent=1 // pred_check
      _
    $region7: #{tpu_custom_call.1} parent=1 // pred_check_branch
      %11 = sbr.rel (0) target = $region9
    $region8: #{tpu_custom_call.1} parent=1 // pred_region
      _
    $region9: #{tpu_custom_call.1} parent=1 // pred_fallthru
      _
    %v13 = vld [vmem:[%s1] sm:$0xff]
    %v14 = vld [vmem:[%s1 + $0x8] sm:$0xff]
    %v15 = vld [vmem:[%s1 + $0x10] sm:$0xff]
    %v16 = vld [vmem:[%s1 + $0x18] sm:$0xff]
    %v17 = vld [vmem:[%s1 + $0x20] sm:$0xff]
    %v18 = vld [vmem:[%s1 + $0x28] sm:$0xff]
    %v19 = vld [vmem:[%s1 + $0x30] sm:$0xff]
    %v20 = vpack.c.bf16 %v14, %v13
    %v21 = vpack.c.bf16 %v16, %v15
    %v22 = vpack.c.bf16 %v18, %v17
    %v23 = vld [vmem:[%s0] sm:$0xff]
    %v24 = vld [vmem:[%s0 + $0x8] sm:$0xff]
    %v25 = vld [vmem:[%s0 + $0x10] sm:$0xff]
    %v26 = vld [vmem:[%s0 + $0x18] sm:$0xff]
    %v27 = vld [vmem:[%s0 + $0x20] sm:$0xff]
    %v28 = vld [vmem:[%s0 + $0x28] sm:$0xff]
    %v29 = vld [vmem:[%s0 + $0x30] sm:$0xff]
    %v30 = vld [vmem:[%s0 + $0x38] sm:$0xff]
    %v31 = vpack.c.bf16 %v24, %v23
    %v32 = vpack.c.bf16 %v26, %v25
    %v33 = vpack.c.bf16 %v28, %v27
    %v34 = vpack.c.bf16 %v30, %v29
    %v35 = vlaneseq
    %v36 = vshrl.u32 %v35, 7
    %v37 = vsub.s32 0, %v36
    %v38 = vrot.slane %v19, %v37
    %vm39 = vcmask 130048
    %v41 = vsel %vm39, %v31, 0
    %v44 = vsel %vm39, %v32, 0
    %v47 = vsel %vm39, %v33, 0
    %v50 = vsel %vm39, %v34, 0
    %52 = vmatprep.subr.bf16.mxu0 0
    %53 = vmatpush1.bf16.msra.mxu0 %v22
    %54 = vmatprep.subr.bf16.mxu0 0
    %55 = vmatpush1.bf16.msra.mxu0 0
    %56 = vmatprep.subr.bf16.mxu0 0
    %57 = vmatpush1.bf16.msra.mxu0 0
    %58 = vmatprep.subr.bf16.mxu0 0
    %59 = vmatpush1.bf16.msra.mxu0 0
    %60 = vmatprep.subr.bf16.mxu0 0
    %61 = vmatpush1.bf16.msra.mxu0 0
    %62 = vmatprep.subr.bf16.mxu0 0
    %63 = vmatpush1.bf16.msra.mxu0 0
    %64 = vmatprep.subr.bf16.mxu0 0
    %65 = vmatpush1.bf16.msra.mxu0 0
    %66 = vmatprep.subr.bf16.mxu0 0
    %67 = vmatpush1.bf16.msra.mxu0 0
    %68 = vmatprep.subr.bf16.mxu0 0
    %69 = vmatpush1.bf16.msra.mxu0 0
    %70 = vmatprep.subr.bf16.mxu0 0
    %71 = vmatpush1.bf16.msra.mxu0 0
    %72 = vmatprep.subr.bf16.mxu0 0
    %73 = vmatpush1.bf16.msra.mxu0 0
    %74 = vmatprep.subr.bf16.mxu0 0
    %75 = vmatpush1.bf16.msra.mxu0 0
    %76 = vmatprep.subr.bf16.mxu0 0
    %77 = vmatpush1.bf16.msra.mxu0 0
    %78 = vmatprep.subr.bf16.mxu0 0
    %79 = vmatpush1.bf16.msra.mxu0 0
    %80 = vmatprep.subr.bf16.mxu0 0
    %81 = vmatpush1.bf16.msra.mxu0 0
    %82 = vmatprep.subr.bf16.mxu0 0
    %83 = vmatpush1.bf16.msra.mxu0 0
    %84 = vmatprep.mubr.bf16.mxu0 0
    %85 = vmatmul.mubr.bf16.gmra.mrb[0].mxu0 %v41
    %v86 = vpop.f32.mrb[0].mxu0
    %v87 = vadd.f32 %v38, %v86
    %v88 = vpop.f32.mrb[0].mxu0
    %v89 = vpop.f32.mrb[0].mxu0
    %v90 = vadd.f32 %v38, %v89
    %v91 = vpop.f32.mrb[0].mxu0
    %92 = vmatprep.mubr.bf16.mxu0 0
    %93 = vmatmul.mubr.bf16.gmra.mrb[0].mxu0 %v44
    %v94 = vpop.f32.mrb[0].mxu0
    %v95 = vadd.f32 %v38, %v94
    %v96 = vpop.f32.mrb[0].mxu0
    %v97 = vpop.f32.mrb[0].mxu0
    %v98 = vadd.f32 %v38, %v97
    %v99 = vpop.f32.mrb[0].mxu0
    %100 = vmatprep.mubr.bf16.mxu0 0
    %101 = vmatmul.mubr.bf16.gmra.mrb[0].mxu0 %v47
    %v102 = vpop.f32.mrb[0].mxu0
    %v103 = vadd.f32 %v38, %v102
    %v104 = vpop.f32.mrb[0].mxu0
    %v105 = vpop.f32.mrb[0].mxu0
    %v106 = vadd.f32 %v38, %v105
    %v107 = vpop.f32.mrb[0].mxu0
    %108 = vmatprep.mubr.bf16.mxu0 0
    %109 = vmatmul.mubr.bf16.gmra.mrb[0].mxu0 %v50
    %v110 = vpop.f32.mrb[0].mxu0
    %v111 = vadd.f32 %v38, %v110
    %v112 = vpop.f32.mrb[0].mxu0
    %v113 = vpop.f32.mrb[0].mxu0
    %v114 = vadd.f32 %v38, %v113
    %v115 = vpop.f32.mrb[0].mxu0
    %116 = vdwg.mxu0
    %vm117 = vcmask 261120
    %v119 = vsel %vm117, 0, 0
    %121 = vmatprep.subr.bf16.mxu0 0
    %122 = vmatpush1.bf16.msra.mxu0 %v20
    %123 = vmatprep.subr.bf16.mxu0 0
    %124 = vmatpush1.bf16.msra.mxu0 %v21
    %125 = vmatprep.subr.bf16.mxu0 0
    %126 = vmatpush1.bf16.msra.mxu0 0
    %127 = vmatprep.subr.bf16.mxu0 0
    %128 = vmatpush1.bf16.msra.mxu0 0
    %129 = vmatprep.subr.bf16.mxu0 0
    %130 = vmatpush1.bf16.msra.mxu0 0
    %131 = vmatprep.subr.bf16.mxu0 0
    %132 = vmatpush1.bf16.msra.mxu0 0
    %133 = vmatprep.subr.bf16.mxu0 0
    %134 = vmatpush1.bf16.msra.mxu0 0
    %135 = vmatprep.subr.bf16.mxu0 0
    %136 = vmatpush1.bf16.msra.mxu0 0
    %137 = vmatprep.subr.bf16.mxu0 0
    %138 = vmatpush1.bf16.msra.mxu0 0
    %139 = vmatprep.subr.bf16.mxu0 0
    %140 = vmatpush1.bf16.msra.mxu0 0
    %141 = vmatprep.subr.bf16.mxu0 0
    %142 = vmatpush1.bf16.msra.mxu0 0
    %143 = vmatprep.subr.bf16.mxu0 0
    %144 = vmatpush1.bf16.msra.mxu0 0
    %145 = vmatprep.subr.bf16.mxu0 0
    %146 = vmatpush1.bf16.msra.mxu0 0
    %147 = vmatprep.subr.bf16.mxu0 0
    %148 = vmatpush1.bf16.msra.mxu0 0
    %149 = vmatprep.subr.bf16.mxu0 0
    %150 = vmatpush1.bf16.msra.mxu0 0
    %151 = vmatprep.subr.bf16.mxu0 0
    %152 = vmatpush1.bf16.msra.mxu0 0
    %153 = vmatprep.mubr.bf16.mxu0 0
    %154 = vmatmul.mubr.bf16.gmra.mrb[0].mxu0 %v119
    %v155 = vpop.f32.mrb[0].mxu0
    %v156 = vadd.f32 %v87, %v155
    %v157 = vpop.f32.mrb[0].mxu0
    %v158 = vpop.f32.mrb[0].mxu0
    %v159 = vpop.f32.mrb[0].mxu0
    %160 = vdwg.mxu0
    %v161 = vxor.u32 %v156, 2147483648
    %v162 = vmul.f32 %v161, 1.442695
    %v163 = vpow.pop %v162
    %v164 = vadd.f32 %v163, 1.0
    %v165 = vrcp.pop %v164
    %v166 = vmul.f32 1.0, %v165
    %v167 = vtanh.pop %v156
    %v168 = vmul.f32 %v166, 0.0
    %170 = vrot.lane.b32.xlu0 %v167, 96
    %v171 = vpop.permute.xlu0 %170
    %v173 = vmul.f32 %v166, %v171
    %175 = vrot.lane.b32.xlu0 %v173, 96
    %v176 = vpop.permute.xlu0 %175
    %v178 = vadd.f32 %v168, %v176
    %v179 = vtanh.pop %v178
    %181 = vrot.lane.b32.xlu0 %v179, 96
    %v182 = vpop.permute.xlu0 %181
    %v184 = vmul.f32 %v166, %v182
    %v185 = vpack.c.bf16 %v184, %v184
    %187 = vrot.lane.b32.xlu0 %v185, 32
    %v188 = vpop.permute.xlu0 %187
    %v190 = vsel %vm117, %v188, 0
    %192 = vmatprep.subr.bf16.mxu0 0
    %193 = vmatpush1.bf16.msra.mxu0 %v20
    %194 = vmatprep.subr.bf16.mxu0 0
    %195 = vmatpush1.bf16.msra.mxu0 %v21
    %196 = vmatprep.subr.bf16.mxu0 0
    %197 = vmatpush1.bf16.msra.mxu0 0
    %198 = vmatprep.subr.bf16.mxu0 0
    %199 = vmatpush1.bf16.msra.mxu0 0
    %200 = vmatprep.subr.bf16.mxu0 0
    %201 = vmatpush1.bf16.msra.mxu0 0
    %202 = vmatprep.subr.bf16.mxu0 0
    %203 = vmatpush1.bf16.msra.mxu0 0
    %204 = vmatprep.subr.bf16.mxu0 0
    %205 = vmatpush1.bf16.msra.mxu0 0
    %206 = vmatprep.subr.bf16.mxu0 0
    %207 = vmatpush1.bf16.msra.mxu0 0
    %208 = vmatprep.subr.bf16.mxu0 0
    %209 = vmatpush1.bf16.msra.mxu0 0
    %210 = vmatprep.subr.bf16.mxu0 0
    %211 = vmatpush1.bf16.msra.mxu0 0
    %212 = vmatprep.subr.bf16.mxu0 0
    %213 = vmatpush1.bf16.msra.mxu0 0
    %214 = vmatprep.subr.bf16.mxu0 0
    %215 = vmatpush1.bf16.msra.mxu0 0
    %216 = vmatprep.subr.bf16.mxu0 0
    %217 = vmatpush1.bf16.msra.mxu0 0
    %218 = vmatprep.subr.bf16.mxu0 0
    %219 = vmatpush1.bf16.msra.mxu0 0
    %220 = vmatprep.subr.bf16.mxu0 0
    %221 = vmatpush1.bf16.msra.mxu0 0
    %222 = vmatprep.subr.bf16.mxu0 0
    %223 = vmatpush1.bf16.msra.mxu0 0
    %224 = vmatprep.mubr.bf16.mxu0 0
    %225 = vmatmul.mubr.bf16.gmra.mrb[0].mxu0 %v190
    %v226 = vpop.f32.mrb[0].mxu0
    %v227 = vadd.f32 %v90, %v226
    %v228 = vpop.f32.mrb[0].mxu0
    %v229 = vpop.f32.mrb[0].mxu0
    %v230 = vpop.f32.mrb[0].mxu0
    %231 = vdwg.mxu0
    %v232 = vxor.u32 %v227, 2147483648
    %v233 = vmul.f32 %v232, 1.442695
    %v234 = vpow.pop %v233
    %v235 = vadd.f32 %v234, 1.0
    %v236 = vrcp.pop %v235
    %v237 = vmul.f32 1.0, %v236
    %v238 = vtanh.pop %v227
    %v239 = vmul.f32 %v237, %v178
    %241 = vrot.lane.b32.xlu0 %v238, 96
    %v242 = vpop.permute.xlu0 %241
    %v244 = vmul.f32 %v237, %v242
    %246 = vrot.lane.b32.xlu0 %v244, 96
    %v247 = vpop.permute.xlu0 %246
    %v249 = vadd.f32 %v239, %v247
    %v250 = vtanh.pop %v249
    %252 = vrot.lane.b32.xlu0 %v250, 96
    %v253 = vpop.permute.xlu0 %252
    %v255 = vmul.f32 %v237, %v253
    %v256 = vpack.c.bf16 %v255, %v255
    %258 = vrot.lane.b32.xlu0 %v256, 32
    %v259 = vpop.permute.xlu0 %258
    %v261 = vsel %vm117, %v259, 0
    %263 = vmatprep.subr.bf16.mxu0 0
    %264 = vmatpush1.bf16.msra.mxu0 %v20
    %265 = vmatprep.subr.bf16.mxu0 0
    %266 = vmatpush1.bf16.msra.mxu0 %v21
    %267 = vmatprep.subr.bf16.mxu0 0
    %268 = vmatpush1.bf16.msra.mxu0 0
    %269 = vmatprep.subr.bf16.mxu0 0
    %270 = vmatpush1.bf16.msra.mxu0 0
    %271 = vmatprep.subr.bf16.mxu0 0
    %272 = vmatpush1.bf16.msra.mxu0 0
    %273 = vmatprep.subr.bf16.mxu0 0
    %274 = vmatpush1.bf16.msra.mxu0 0
    %275 = vmatprep.subr.bf16.mxu0 0
    %276 = vmatpush1.bf16.msra.mxu0 0
    %277 = vmatprep.subr.bf16.mxu0 0
    %278 = vmatpush1.bf16.msra.mxu0 0
    %279 = vmatprep.subr.bf16.mxu0 0
    %280 = vmatpush1.bf16.msra.mxu0 0
    %281 = vmatprep.subr.bf16.mxu0 0
    %282 = vmatpush1.bf16.msra.mxu0 0
    %283 = vmatprep.subr.bf16.mxu0 0
    %284 = vmatpush1.bf16.msra.mxu0 0
    %285 = vmatprep.subr.bf16.mxu0 0
    %286 = vmatpush1.bf16.msra.mxu0 0
    %287 = vmatprep.subr.bf16.mxu0 0
    %288 = vmatpush1.bf16.msra.mxu0 0
    %289 = vmatprep.subr.bf16.mxu0 0
    %290 = vmatpush1.bf16.msra.mxu0 0
    %291 = vmatprep.subr.bf16.mxu0 0
    %292 = vmatpush1.bf16.msra.mxu0 0
    %293 = vmatprep.subr.bf16.mxu0 0
    %294 = vmatpush1.bf16.msra.mxu0 0
    %295 = vmatprep.mubr.bf16.mxu0 0
    %296 = vmatmul.mubr.bf16.gmra.mrb[0].mxu0 %v261
    %v297 = vpop.f32.mrb[0].mxu0
    %v298 = vadd.f32 %v95, %v297
    %v299 = vpop.f32.mrb[0].mxu0
    %v300 = vpop.f32.mrb[0].mxu0
    %v301 = vpop.f32.mrb[0].mxu0
    %302 = vdwg.mxu0
    %v303 = vxor.u32 %v298, 2147483648
    %v304 = vmul.f32 %v303, 1.442695
    %v305 = vpow.pop %v304
    %v306 = vadd.f32 %v305, 1.0
    %v307 = vrcp.pop %v306
    %v308 = vmul.f32 1.0, %v307
    %v309 = vtanh.pop %v298
    %v310 = vmul.f32 %v308, %v249
    %312 = vrot.lane.b32.xlu0 %v309, 96
    %v313 = vpop.permute.xlu0 %312
    %v315 = vmul.f32 %v308, %v313
    %317 = vrot.lane.b32.xlu0 %v315, 96
    %v318 = vpop.permute.xlu0 %317
    %v320 = vadd.f32 %v310, %v318
    %v321 = vtanh.pop %v320
    %323 = vrot.lane.b32.xlu0 %v321, 96
    %v324 = vpop.permute.xlu0 %323
    %v326 = vmul.f32 %v308, %v324
    %v327 = vpack.c.bf16 %v326, %v326
    %329 = vrot.lane.b32.xlu0 %v327, 32
    %v330 = vpop.permute.xlu0 %329
    %v332 = vsel %vm117, %v330, 0
    %334 = vmatprep.subr.bf16.mxu0 0
    %335 = vmatpush1.bf16.msra.mxu0 %v20
    %336 = vmatprep.subr.bf16.mxu0 0
    %337 = vmatpush1.bf16.msra.mxu0 %v21
    %338 = vmatprep.subr.bf16.mxu0 0
    %339 = vmatpush1.bf16.msra.mxu0 0
    %340 = vmatprep.subr.bf16.mxu0 0
    %341 = vmatpush1.bf16.msra.mxu0 0
    %342 = vmatprep.subr.bf16.mxu0 0
    %343 = vmatpush1.bf16.msra.mxu0 0
    %344 = vmatprep.subr.bf16.mxu0 0
    %345 = vmatpush1.bf16.msra.mxu0 0
    %346 = vmatprep.subr.bf16.mxu0 0
    %347 = vmatpush1.bf16.msra.mxu0 0
    %348 = vmatprep.subr.bf16.mxu0 0
    %349 = vmatpush1.bf16.msra.mxu0 0
    %350 = vmatprep.subr.bf16.mxu0 0
    %351 = vmatpush1.bf16.msra.mxu0 0
    %352 = vmatprep.subr.bf16.mxu0 0
    %353 = vmatpush1.bf16.msra.mxu0 0
    %354 = vmatprep.subr.bf16.mxu0 0
    %355 = vmatpush1.bf16.msra.mxu0 0
    %356 = vmatprep.subr.bf16.mxu0 0
    %357 = vmatpush1.bf16.msra.mxu0 0
    %358 = vmatprep.subr.bf16.mxu0 0
    %359 = vmatpush1.bf16.msra.mxu0 0
    %360 = vmatprep.subr.bf16.mxu0 0
    %361 = vmatpush1.bf16.msra.mxu0 0
    %362 = vmatprep.subr.bf16.mxu0 0
    %363 = vmatpush1.bf16.msra.mxu0 0
    %364 = vmatprep.subr.bf16.mxu0 0
    %365 = vmatpush1.bf16.msra.mxu0 0
    %366 = vmatprep.mubr.bf16.mxu0 0
    %367 = vmatmul.mubr.bf16.gmra.mrb[0].mxu0 %v332
    %v368 = vpop.f32.mrb[0].mxu0
    %v369 = vadd.f32 %v98, %v368
    %v370 = vpop.f32.mrb[0].mxu0
    %v371 = vpop.f32.mrb[0].mxu0
    %v372 = vpop.f32.mrb[0].mxu0
    %373 = vdwg.mxu0
    %v374 = vxor.u32 %v369, 2147483648
    %v375 = vmul.f32 %v374, 1.442695
    %v376 = vpow.pop %v375
    %v377 = vadd.f32 %v376, 1.0
    %v378 = vrcp.pop %v377
    %v379 = vmul.f32 1.0, %v378
    %v380 = vtanh.pop %v369
    %v381 = vmul.f32 %v379, %v320
    %383 = vrot.lane.b32.xlu0 %v380, 96
    %v384 = vpop.permute.xlu0 %383
    %v386 = vmul.f32 %v379, %v384
    %388 = vrot.lane.b32.xlu0 %v386, 96
    %v389 = vpop.permute.xlu0 %388
    %v391 = vadd.f32 %v381, %v389
    %v392 = vtanh.pop %v391
    %394 = vrot.lane.b32.xlu0 %v392, 96
    %v395 = vpop.permute.xlu0 %394
    %v397 = vmul.f32 %v379, %v395
    %v398 = vpack.c.bf16 %v397, %v397
    %400 = vrot.lane.b32.xlu0 %v398, 32
    %v401 = vpop.permute.xlu0 %400
    %v403 = vsel %vm117, %v401, 0
    %405 = vmatprep.subr.bf16.mxu0 0
    %406 = vmatpush1.bf16.msra.mxu0 %v20
    %407 = vmatprep.subr.bf16.mxu0 0
    %408 = vmatpush1.bf16.msra.mxu0 %v21
    %409 = vmatprep.subr.bf16.mxu0 0
    %410 = vmatpush1.bf16.msra.mxu0 0
    %411 = vmatprep.subr.bf16.mxu0 0
    %412 = vmatpush1.bf16.msra.mxu0 0
    %413 = vmatprep.subr.bf16.mxu0 0
    %414 = vmatpush1.bf16.msra.mxu0 0
    %415 = vmatprep.subr.bf16.mxu0 0
    %416 = vmatpush1.bf16.msra.mxu0 0
    %417 = vmatprep.subr.bf16.mxu0 0
    %418 = vmatpush1.bf16.msra.mxu0 0
    %419 = vmatprep.subr.bf16.mxu0 0
    %420 = vmatpush1.bf16.msra.mxu0 0
    %421 = vmatprep.subr.bf16.mxu0 0
    %422 = vmatpush1.bf16.msra.mxu0 0
    %423 = vmatprep.subr.bf16.mxu0 0
    %424 = vmatpush1.bf16.msra.mxu0 0
    %425 = vmatprep.subr.bf16.mxu0 0
    %426 = vmatpush1.bf16.msra.mxu0 0
    %427 = vmatprep.subr.bf16.mxu0 0
    %428 = vmatpush1.bf16.msra.mxu0 0
    %429 = vmatprep.subr.bf16.mxu0 0
    %430 = vmatpush1.bf16.msra.mxu0 0
    %431 = vmatprep.subr.bf16.mxu0 0
    %432 = vmatpush1.bf16.msra.mxu0 0
    %433 = vmatprep.subr.bf16.mxu0 0
    %434 = vmatpush1.bf16.msra.mxu0 0
    %435 = vmatprep.subr.bf16.mxu0 0
    %436 = vmatpush1.bf16.msra.mxu0 0
    %437 = vmatprep.mubr.bf16.mxu0 0
    %438 = vmatmul.mubr.bf16.gmra.mrb[0].mxu0 %v403
    %v439 = vpop.f32.mrb[0].mxu0
    %v440 = vadd.f32 %v103, %v439
    %v441 = vpop.f32.mrb[0].mxu0
    %v442 = vpop.f32.mrb[0].mxu0
    %v443 = vpop.f32.mrb[0].mxu0
    %444 = vdwg.mxu0
    %v445 = vxor.u32 %v440, 2147483648
    %v446 = vmul.f32 %v445, 1.442695
    %v447 = vpow.pop %v446
    %v448 = vadd.f32 %v447, 1.0
    %v449 = vrcp.pop %v448
    %v450 = vmul.f32 1.0, %v449
    %v451 = vtanh.pop %v440
    %v452 = vmul.f32 %v450, %v391
    %454 = vrot.lane.b32.xlu0 %v451, 96
    %v455 = vpop.permute.xlu0 %454
    %v457 = vmul.f32 %v450, %v455
    %459 = vrot.lane.b32.xlu0 %v457, 96
    %v460 = vpop.permute.xlu0 %459
    %v462 = vadd.f32 %v452, %v460
    %v463 = vtanh.pop %v462
    %465 = vrot.lane.b32.xlu0 %v463, 96
    %v466 = vpop.permute.xlu0 %465
    %v468 = vmul.f32 %v450, %v466
    %v469 = vpack.c.bf16 %v468, %v468
    %471 = vrot.lane.b32.xlu0 %v469, 32
    %v472 = vpop.permute.xlu0 %471
    %v474 = vsel %vm117, %v472, 0
    %476 = vmatprep.subr.bf16.mxu0 0
    %477 = vmatpush1.bf16.msra.mxu0 %v20
    %478 = vmatprep.subr.bf16.mxu0 0
    %479 = vmatpush1.bf16.msra.mxu0 %v21
    %480 = vmatprep.subr.bf16.mxu0 0
    %481 = vmatpush1.bf16.msra.mxu0 0
    %482 = vmatprep.subr.bf16.mxu0 0
    %483 = vmatpush1.bf16.msra.mxu0 0
    %484 = vmatprep.subr.bf16.mxu0 0
    %485 = vmatpush1.bf16.msra.mxu0 0
    %486 = vmatprep.subr.bf16.mxu0 0
    %487 = vmatpush1.bf16.msra.mxu0 0
    %488 = vmatprep.subr.bf16.mxu0 0
    %489 = vmatpush1.bf16.msra.mxu0 0
    %490 = vmatprep.subr.bf16.mxu0 0
    %491 = vmatpush1.bf16.msra.mxu0 0
    %492 = vmatprep.subr.bf16.mxu0 0
    %493 = vmatpush1.bf16.msra.mxu0 0
    %494 = vmatprep.subr.bf16.mxu0 0
    %495 = vmatpush1.bf16.msra.mxu0 0
    %496 = vmatprep.subr.bf16.mxu0 0
    %497 = vmatpush1.bf16.msra.mxu0 0
    %498 = vmatprep.subr.bf16.mxu0 0
    %499 = vmatpush1.bf16.msra.mxu0 0
    %500 = vmatprep.subr.bf16.mxu0 0
    %501 = vmatpush1.bf16.msra.mxu0 0
    %502 = vmatprep.subr.bf16.mxu0 0
    %503 = vmatpush1.bf16.msra.mxu0 0
    %504 = vmatprep.subr.bf16.mxu0 0
    %505 = vmatpush1.bf16.msra.mxu0 0
    %506 = vmatprep.subr.bf16.mxu0 0
    %507 = vmatpush1.bf16.msra.mxu0 0
    %508 = vmatprep.mubr.bf16.mxu0 0
    %509 = vmatmul.mubr.bf16.gmra.mrb[0].mxu0 %v474
    %v510 = vpop.f32.mrb[0].mxu0
    %v511 = vadd.f32 %v106, %v510
    %v512 = vpop.f32.mrb[0].mxu0
    %v513 = vpop.f32.mrb[0].mxu0
    %v514 = vpop.f32.mrb[0].mxu0
    %515 = vdwg.mxu0
    %v516 = vxor.u32 %v511, 2147483648
    %v517 = vmul.f32 %v516, 1.442695
    %v518 = vpow.pop %v517
    %v519 = vadd.f32 %v518, 1.0
    %v520 = vrcp.pop %v519
    %v521 = vmul.f32 1.0, %v520
    %v522 = vtanh.pop %v511
    %v523 = vmul.f32 %v521, %v462
    %525 = vrot.lane.b32.xlu0 %v522, 96
    %v526 = vpop.permute.xlu0 %525
    %v528 = vmul.f32 %v521, %v526
    %530 = vrot.lane.b32.xlu0 %v528, 96
    %v531 = vpop.permute.xlu0 %530
    %v533 = vadd.f32 %v523, %v531
    %v534 = vtanh.pop %v533
    %536 = vrot.lane.b32.xlu0 %v534, 96
    %v537 = vpop.permute.xlu0 %536
    %v539 = vmul.f32 %v521, %v537
    %v540 = vpack.c.bf16 %v539, %v539
    %542 = vrot.lane.b32.xlu0 %v540, 32
    %v543 = vpop.permute.xlu0 %542
    %v545 = vsel %vm117, %v543, 0
    %547 = vmatprep.subr.bf16.mxu0 0
    %548 = vmatpush1.bf16.msra.mxu0 %v20
    %549 = vmatprep.subr.bf16.mxu0 0
    %550 = vmatpush1.bf16.msra.mxu0 %v21
    %551 = vmatprep.subr.bf16.mxu0 0
    %552 = vmatpush1.bf16.msra.mxu0 0
    %553 = vmatprep.subr.bf16.mxu0 0
    %554 = vmatpush1.bf16.msra.mxu0 0
    %555 = vmatprep.subr.bf16.mxu0 0
    %556 = vmatpush1.bf16.msra.mxu0 0
    %557 = vmatprep.subr.bf16.mxu0 0
    %558 = vmatpush1.bf16.msra.mxu0 0
    %559 = vmatprep.subr.bf16.mxu0 0
    %560 = vmatpush1.bf16.msra.mxu0 0
    %561 = vmatprep.subr.bf16.mxu0 0
    %562 = vmatpush1.bf16.msra.mxu0 0
    %563 = vmatprep.subr.bf16.mxu0 0
    %564 = vmatpush1.bf16.msra.mxu0 0
    %565 = vmatprep.subr.bf16.mxu0 0
    %566 = vmatpush1.bf16.msra.mxu0 0
    %567 = vmatprep.subr.bf16.mxu0 0
    %568 = vmatpush1.bf16.msra.mxu0 0
    %569 = vmatprep.subr.bf16.mxu0 0
    %570 = vmatpush1.bf16.msra.mxu0 0
    %571 = vmatprep.subr.bf16.mxu0 0
    %572 = vmatpush1.bf16.msra.mxu0 0
    %573 = vmatprep.subr.bf16.mxu0 0
    %574 = vmatpush1.bf16.msra.mxu0 0
    %575 = vmatprep.subr.bf16.mxu0 0
    %576 = vmatpush1.bf16.msra.mxu0 0
    %577 = vmatprep.subr.bf16.mxu0 0
    %578 = vmatpush1.bf16.msra.mxu0 0
    %579 = vmatprep.mubr.bf16.mxu0 0
    %580 = vmatmul.mubr.bf16.gmra.mrb[0].mxu0 %v545
    %v581 = vpop.f32.mrb[0].mxu0
    %v582 = vadd.f32 %v111, %v581
    %v583 = vpop.f32.mrb[0].mxu0
    %v584 = vpop.f32.mrb[0].mxu0
    %v585 = vpop.f32.mrb[0].mxu0
    %586 = vdwg.mxu0
    %v587 = vxor.u32 %v582, 2147483648
    %v588 = vmul.f32 %v587, 1.442695
    %v589 = vpow.pop %v588
    %v590 = vadd.f32 %v589, 1.0
    %v591 = vrcp.pop %v590
    %v592 = vmul.f32 1.0, %v591
    %v593 = vtanh.pop %v582
    %v594 = vmul.f32 %v592, %v533
    %596 = vrot.lane.b32.xlu0 %v593, 96
    %v597 = vpop.permute.xlu0 %596
    %v599 = vmul.f32 %v592, %v597
    %601 = vrot.lane.b32.xlu0 %v599, 96
    %v602 = vpop.permute.xlu0 %601
    %v604 = vadd.f32 %v594, %v602
    %v605 = vtanh.pop %v604
    %607 = vrot.lane.b32.xlu0 %v605, 96
    %v608 = vpop.permute.xlu0 %607
    %v610 = vmul.f32 %v592, %v608
    %v611 = vpack.c.bf16 %v610, %v610
    %613 = vrot.lane.b32.xlu0 %v611, 32
    %v614 = vpop.permute.xlu0 %613
    %v616 = vsel %vm117, %v614, 0
    %618 = vmatprep.subr.bf16.mxu0 0
    %619 = vmatpush1.bf16.msra.mxu0 %v20
    %620 = vmatprep.subr.bf16.mxu0 0
    %621 = vmatpush1.bf16.msra.mxu0 %v21
    %622 = vmatprep.subr.bf16.mxu0 0
    %623 = vmatpush1.bf16.msra.mxu0 0
    %624 = vmatprep.subr.bf16.mxu0 0
    %625 = vmatpush1.bf16.msra.mxu0 0
    %626 = vmatprep.subr.bf16.mxu0 0
    %627 = vmatpush1.bf16.msra.mxu0 0
    %628 = vmatprep.subr.bf16.mxu0 0
    %629 = vmatpush1.bf16.msra.mxu0 0
    %630 = vmatprep.subr.bf16.mxu0 0
    %631 = vmatpush1.bf16.msra.mxu0 0
    %632 = vmatprep.subr.bf16.mxu0 0
    %633 = vmatpush1.bf16.msra.mxu0 0
    %634 = vmatprep.subr.bf16.mxu0 0
    %635 = vmatpush1.bf16.msra.mxu0 0
    %636 = vmatprep.subr.bf16.mxu0 0
    %637 = vmatpush1.bf16.msra.mxu0 0
    %638 = vmatprep.subr.bf16.mxu0 0
    %639 = vmatpush1.bf16.msra.mxu0 0
    %640 = vmatprep.subr.bf16.mxu0 0
    %641 = vmatpush1.bf16.msra.mxu0 0
    %642 = vmatprep.subr.bf16.mxu0 0
    %643 = vmatpush1.bf16.msra.mxu0 0
    %644 = vmatprep.subr.bf16.mxu0 0
    %645 = vmatpush1.bf16.msra.mxu0 0
    %646 = vmatprep.subr.bf16.mxu0 0
    %647 = vmatpush1.bf16.msra.mxu0 0
    %648 = vmatprep.subr.bf16.mxu0 0
    %649 = vmatpush1.bf16.msra.mxu0 0
    %650 = vmatprep.mubr.bf16.mxu0 0
    %651 = vmatmul.mubr.bf16.gmra.mrb[0].mxu0 %v616
    %v652 = vpop.f32.mrb[0].mxu0
    %v653 = vadd.f32 %v114, %v652
    %v654 = vpop.f32.mrb[0].mxu0
    %v655 = vpop.f32.mrb[0].mxu0
    %v656 = vpop.f32.mrb[0].mxu0
    %657 = vdwg.mxu0
    %v658 = vxor.u32 %v653, 2147483648
    %v659 = vmul.f32 %v658, 1.442695
    %v660 = vpow.pop %v659
    %v661 = vadd.f32 %v660, 1.0
    %v662 = vrcp.pop %v661
    %v663 = vmul.f32 1.0, %v662
    %v664 = vtanh.pop %v653
    %v665 = vmul.f32 %v663, %v604
    %667 = vrot.lane.b32.xlu0 %v664, 96
    %v668 = vpop.permute.xlu0 %667
    %v670 = vmul.f32 %v663, %v668
    %672 = vrot.lane.b32.xlu0 %v670, 96
    %v673 = vpop.permute.xlu0 %672
    %v675 = vadd.f32 %v665, %v673
    %v676 = vtanh.pop %v675
    %678 = vrot.lane.b32.xlu0 %v676, 96
    %v679 = vpop.permute.xlu0 %678
    %v681 = vmul.f32 %v663, %v679
    %683 = vrot.lane.b32.xlu0 %v184, 32
    %v684 = vpop.permute.xlu0 %683
    %687 = vrot.lane.b32.xlu0 %v255, 64
    %v688 = vpop.permute.xlu0 %687
    %691 = vrot.lane.b32.xlu0 %v326, 96
    %v692 = vpop.permute.xlu0 %691
    %695 = vrot.lane.b32.xlu0 %v468, 32
    %v696 = vpop.permute.xlu0 %695
    %699 = vrot.lane.b32.xlu0 %v539, 64
    %v700 = vpop.permute.xlu0 %699
    %703 = vrot.lane.b32.xlu0 %v610, 96
    %v704 = vpop.permute.xlu0 %703
    %707 = vrot.lane.b32.xlu0 %v249, 32
    %v708 = vpop.permute.xlu0 %707
    %711 = vrot.lane.b32.xlu0 %v320, 64
    %v712 = vpop.permute.xlu0 %711
    %715 = vrot.lane.b32.xlu0 %v391, 96
    %v716 = vpop.permute.xlu0 %715
    %719 = vrot.lane.b32.xlu0 %v533, 32
    %v720 = vpop.permute.xlu0 %719
    %723 = vrot.lane.b32.xlu0 %v604, 64
    %v724 = vpop.permute.xlu0 %723
    %727 = vrot.lane.b32.xlu0 %v675, 96
    %v728 = vpop.permute.xlu0 %727
    %v730 = vsel %vm117, %v684, %v688
    %vm731 = vcmask 523264
    %v732 = vsel %vm731, %v730, %v692
    %vm733 = vcmask 785408
    %v734 = vsel %vm733, %v732, %v397
    %v735 = vsel %vm117, %v696, %v700
    %v736 = vsel %vm731, %v735, %v704
    %v737 = vsel %vm733, %v736, %v681
    %v738 = vsel %vm117, %v178, %v708
    %v739 = vsel %vm731, %v738, %v712
    %v740 = vsel %vm733, %v739, %v716
    %v741 = vsel %vm117, %v462, %v720
    %v742 = vsel %vm731, %v741, %v724
    %v743 = vsel %vm733, %v742, %v728
    %744 = vst [vmem:[#allocation2] sm:$0xff] %v734
    %745 = vst [vmem:[#allocation2 + $0x8] sm:$0xff] %v737
    %746 = vst [vmem:[#allocation2 + $0x10] sm:$0xff] %v740
    %747 = vst [vmem:[#allocation2 + $0x18] sm:$0xff] %v743
    // Predicated region
    $region10: #{tpu_custom_call.1} parent=1 // pred_check
      _
    $region11: #{tpu_custom_call.1} parent=1 // pred_check_branch
      %749 = sbr.rel (0) target = $region13
    $region12: #{tpu_custom_call.1} parent=1 // pred_region
      %s751 = ssub.s32 512, 512
      %752 = vsyncadd [#allocation3], %s751
      %s754 = sshll.u32 [#allocation2], 4
      %s755 = int_to_ptr.vmem [resolvable:$true] %s754
      %757 = dma.vmem_to_hbm [thread:$0]  %s755, 512, %s2, [#allocation3]
    $region13: #{tpu_custom_call.1} parent=1 // pred_fallthru
      _
    // Predicated region
    $region14: #{tpu_custom_call.1} parent=1 // pred_check
      _
    $region15: #{tpu_custom_call.1} parent=1 // pred_check_branch
      %759 = sbr.rel (0) target = $region17
    $region16: #{tpu_custom_call.1} parent=1 // pred_region
      %760 = dma.done [#allocation3], 512
    $region17: #{tpu_custom_call.1} parent=1 // pred_fallthru
      _
    %761 = vsyncpa [#allocation3], 1

</llo_original>
